<compile_context>
chip_gen: v7x
topology: tpu7x:2x2x1
jax: 0.10.0
libtpu: 0.0.40
codegen_flags: <defaults>
</compile_context>

<pallas_src>
import functools

import numpy as np
import jax
import jax.numpy as jnp
from jax.experimental import pallas as pl
from jax.experimental.pallas import tpu as pltpu


# ----------------------------- host-side constants ----------------------------

def adaptive_pool_matrix(out_size: int, in_size: int) -> np.ndarray:
    """P[p, i] so that (P @ v) reproduces nn.AdaptiveAvgPool1d bins."""
    P = np.zeros((out_size, in_size), dtype=np.float32)
    for p in range(out_size):
        start = (p * in_size) // out_size
        end = -((-(p + 1) * in_size) // out_size)  # ceil((p+1)*in/out)
        P[p, start:end] = 1.0 / (end - start)
    return P


def upsample_matrix(out_size: int, in_size: int) -> np.ndarray:
    """U[i, p]: bilinear (1-D linear) interpolation weights, align_corners=True."""
    U = np.zeros((out_size, in_size), dtype=np.float32)
    if in_size == 1:
        U[:, 0] = 1.0
        return U
    for i in range(out_size):
        src = i * (in_size - 1) / (out_size - 1)
        p0 = min(int(np.floor(src)), in_size - 1)
        p1 = min(p0 + 1, in_size - 1)
        frac = src - p0
        U[i, p0] += 1.0 - frac
        U[i, p1] += frac
    return U


@functools.lru_cache(maxsize=None)
def _build_ppm_constants(bins, H, W, compute_dtype):
    """Pooling matrices (all bins concatenated) + per-bin compact upsample matrices.

    Returns:
      mpoolT : (H*W, bb_total)           pooled axis = concat of all bins' b*b columns
      mup    : (nbins, bb_max, H*W)      per-bin bilinear matrices, zero-padded only up
                                         to bb_max = max(b*b) (exact-ish K, not bb_total)
      bbs, offs, bb_max
    """
    HW = H * W
    bbs = tuple(b * b for b in bins)
    offs = tuple(int(o) for o in np.cumsum((0,) + bbs[:-1]))
    bb_total = int(sum(bbs))
    bb_max = int(max(bbs))

    mpoolT = np.zeros((HW, bb_total), np.float32)
    mup = np.zeros((len(bins), bb_max, HW), np.float32)
    for i, b in enumerate(bins):
        Ph = adaptive_pool_matrix(b, H)
        Pw = adaptive_pool_matrix(b, W)
        Uh = upsample_matrix(H, b)
        Uw = upsample_matrix(W, b)
        mpoolT[:, offs[i]:offs[i] + bbs[i]] = np.kron(Ph, Pw).T   # (b*b, HW).T
        mup[i, :bbs[i], :] = np.kron(Uh, Uw).T                    # (HW, b*b).T
    return (jnp.asarray(mpoolT, compute_dtype),
            jnp.asarray(mup, compute_dtype),
            bbs, offs, bb_max)


# ------------------------------ sizing helpers ---------------------------------

def _vmem_capacity() -> int:
    try:
        return int(pltpu.get_tpu_info().vmem_capacity_bytes)
    except Exception:
        return 64 << 20          # conservative (v7x-sized) fallback


def _round_up(x, m):
    return -(-x // m) * m


def _estimate_vmem(blocks, vmem_cap):
    """Sum (padded) block footprints, add headroom, clamp below physical VMEM."""
    total = 0
    for shape, dtype, bufs in blocks:
        s = list(shape)
        s[-1] = _round_up(s[-1], 128)
        if len(s) >= 2:
            s[-2] = _round_up(s[-2], 8)
        total += int(np.prod(s)) * np.dtype(dtype).itemsize * bufs
    total = int(total * 1.5)                       # headroom for compiler scratch
    return int(min(max(total, 32 << 20), vmem_cap - (4 << 20)))


def _pick_channel_tile(C: int, vmem_cap: int) -> int:
    """tc = 512 on 128-MiB-VMEM chips (v5e/v6e), 256 on v7x; multiple of 128 if tiled."""
    max_tile = 512 if vmem_cap >= (100 << 20) else 256
    if C <= max_tile:
        return C
    t = (max_tile // 128) * 128
    while t >= 128:
        if C % t == 0:
            return t
        t -= 128
    return C


def _pick_hw_tile(HW: int, max_tile: int = 2048) -> int:
    if HW <= max_tile:
        return HW
    t = (max_tile // 128) * 128
    while t >= 128:
        if HW % t == 0:
            return t
        t -= 128
    return HW    # full dim is always a legal block


# ------------------------------ Pallas kernels ---------------------------------

def _pool_conv_kernel(x_ref, mpoolT_ref, w_ref, bias_ref, y_ref, acc_ref,
                      *, nbins, red_dim, bbs, offs, bb_max):
    # x_ref:      (1, tc, HW)   f32 (native) — cast to compute dtype in-kernel
    # mpoolT_ref: (HW, bb_total)
    # w_ref:      (R_total, tc)            stacked 1x1 conv weights (BN folded)
    # bias_ref:   (R_total, 1)  f32        stacked BN shifts
    # y_ref:      (1, nbins, red_dim, bb_max)   compact per-bin pooled output
    # acc_ref:    (R_total, bb_total) f32  accumulator across channel tiles
    c_idx = pl.program_id(1)

    @pl.when(c_idx == 0)
    def _init():
        # fold the bias into the accumulator init (saves a finalize add + VMEM)
        acc_ref[...] = jnp.broadcast_to(bias_ref[...], acc_ref.shape)

    x = x_ref[0].astype(mpoolT_ref.dtype)                            # in-kernel cast
    pooled = jnp.dot(x, mpoolT_ref[...],
                     preferred_element_type=jnp.float32)             # (tc, bb_total)
    acc_ref[...] += jnp.dot(w_ref[...], pooled.astype(w_ref.dtype),
                            preferred_element_type=jnp.float32)      # (R_total, bb_total)

    @pl.when(c_idx == pl.num_programs(1) - 1)
    def _finalize():
        y = jnp.maximum(acc_ref[...], 0.0)                           # ReLU, f32
        for i in range(nbins):                                       # per-bin stores
            yi = y[i * red_dim:(i + 1) * red_dim,
                   offs[i]:offs[i] + bbs[i]].astype(y_ref.dtype)
            if bbs[i] < bb_max:
                yi = jnp.concatenate(
                    [yi, jnp.zeros((red_dim, bb_max - bbs[i]), y_ref.dtype)], axis=1)
            y_ref[0, i] = yi


def _upsample_kernel(y_ref, mup_ref, o_ref):
    # y_ref:   (1, 1, red_dim, bb_max)
    # mup_ref: (1, bb_max, hw_t)
    # o_ref:   (1, 1, red_dim, hw_t)
    o_ref[0, 0] = jnp.dot(y_ref[0, 0], mup_ref[0],
                          preferred_element_type=jnp.float32).astype(o_ref.dtype)


# ------------------------------ pallas_call wrappers ----------------------------

def ppm_pool_conv(x_flat, mpoolT, w_all, bias_all, *, nbins, red_dim, bbs, offs,
                  bb_max, tc, vmem_cap):
    """Pool + 1x1 conv (BN folded) + ReLU. Returns (N, nbins, red_dim, bb_max)."""
    N, C, HW = x_flat.shape
    bb_total = mpoolT.shape[1]
    R_total = w_all.shape[0]
    n_ct = C // tc
    cdt = mpoolT.dtype

    vmem = _estimate_vmem([
        ((1, tc, HW), x_flat.dtype, 2),
        ((HW, bb_total), cdt, 2),
        ((R_total, tc), cdt, 2),
        ((R_total, 1), jnp.float32, 2),
        ((1, nbins, red_dim, bb_max), cdt, 2),
        ((R_total, bb_total), jnp.float32, 1),
    ], vmem_cap)

    kernel = functools.partial(_pool_conv_kernel, nbins=nbins, red_dim=red_dim,
                               bbs=tuple(bbs), offs=tuple(offs), bb_max=bb_max)
    return pl.pallas_call(
        kernel,
        out_shape=jax.ShapeDtypeStruct((N, nbins, red_dim, bb_max), cdt),
        grid_spec=pltpu.PrefetchScalarGridSpec(
            num_scalar_prefetch=0,
            grid=(N, n_ct),
            in_specs=[
                pl.BlockSpec((1, tc, HW), lambda n, c: (n, c, 0)),
                pl.BlockSpec((HW, bb_total), lambda n, c: (0, 0)),
                pl.BlockSpec((R_total, tc), lambda n, c: (0, c)),
                pl.BlockSpec((R_total, 1), lambda n, c: (0, 0)),
            ],
            out_specs=pl.BlockSpec((1, nbins, red_dim, bb_max),
                                   lambda n, c: (n, 0, 0, 0)),
            scratch_shapes=[pltpu.VMEM((R_total, bb_total), jnp.float32)],
        ),
        compiler_params=pltpu.CompilerParams(
            dimension_semantics=("parallel", "arbitrary"),
            vmem_limit_bytes=vmem),
    )(x_flat, mpoolT, w_all, bias_all)


def ppm_upsample(y_packed, mup, *, HW, out_dtype, vmem_cap):
    """Bilinear upsample per bin. Returns (N, nbins, red_dim, HW) in out_dtype."""
    N, nbins, red_dim, bb_max = y_packed.shape
    hw_t = _pick_hw_tile(HW)
    n_hw = HW // hw_t

    vmem = _estimate_vmem([
        ((1, 1, red_dim, bb_max), y_packed.dtype, 2),
        ((1, bb_max, hw_t), mup.dtype, 2),
        ((1, 1, red_dim, hw_t), out_dtype, 2),
    ], vmem_cap)

    return pl.pallas_call(
        _upsample_kernel,
        out_shape=jax.ShapeDtypeStruct((N, nbins, red_dim, HW), out_dtype),
        grid_spec=pltpu.PrefetchScalarGridSpec(
            num_scalar_prefetch=0,
            grid=(N, nbins, n_hw),
            in_specs=[
                pl.BlockSpec((1, 1, red_dim, bb_max), lambda n, i, h: (n, i, 0, 0)),
                pl.BlockSpec((1, bb_max, hw_t), lambda n, i, h: (i, 0, h)),
            ],
            out_specs=pl.BlockSpec((1, 1, red_dim, hw_t),
                                   lambda n, i, h: (n, i, 0, h)),
        ),
        compiler_params=pltpu.CompilerParams(
            dimension_semantics=("parallel", "parallel", "parallel"),
            vmem_limit_bytes=vmem),
    )(y_packed, mup)


# ------------------------------- PPM module -----------------------------------

def make_ppm_params(key, in_dim, reduction_dim, bins):
    """Deterministic synthetic parameters (conv weight + eval-mode BN stats)."""
    # TODO(synk): training-mode BatchNorm (batch statistics / running-stat updates)
    # is not implemented; eval-mode running stats are folded into the 1x1 conv.
    params = []
    for b in bins:
        key, k1, k2, k3, k4, k5 = jax.random.split(key, 6)
        conv_w = 0.1 * jax.random.normal(k1, (reduction_dim, in_dim), jnp.float32)
        gamma = 1.0 + 0.1 * jax.random.normal(k2, (reduction_dim,), jnp.float32)
        beta = 0.1 * jax.random.normal(k3, (reduction_dim,), jnp.float32)
        run_mean = 0.05 * jax.random.normal(k4, (reduction_dim,), jnp.float32)
        run_var = 1.0 + 0.1 * jnp.abs(jax.random.normal(k5, (reduction_dim,), jnp.float32))
        params.append(dict(bin=b, conv_w=conv_w, gamma=gamma, beta=beta,
                           mean=run_mean, var=run_var))
    return params


def ppm_forward(x, params, eps=1e-5, compute_dtype=jnp.bfloat16, tc=None):
    """x: (N, C, H, W) float32. Returns (N, C + len(bins)*R, H, W) float32."""
    N, C, H, W = x.shape
    HW = H * W
    bins = tuple(int(p["bin"]) for p in params)
    nbins = len(bins)
    red_dim = params[0]["conv_w"].shape[0]
    mpoolT, mup, bbs, offs, bb_max = _build_ppm_constants(bins, H, W, compute_dtype)

    # fold eval-mode BatchNorm into the (bias-free) 1x1 conv, stacked over bins
    w_list, b_list = [], []
    for p in params:
        scale = p["gamma"] / jnp.sqrt(p["var"] + eps)        # (R,)
        shift = p["beta"] - p["mean"] * scale                # (R,)
        w_list.append(p["conv_w"] * scale[:, None])          # (R, C)
        b_list.append(shift[:, None])                        # (R, 1)
    w_all = jnp.concatenate(w_list, axis=0).astype(compute_dtype)   # (nbins*R, C)
    bias_all = jnp.concatenate(b_list, axis=0)                      # (nbins*R, 1) f32

    vmem_cap = _vmem_capacity()
    if tc is None:
        tc = _pick_channel_tile(C, vmem_cap)
    assert C % tc == 0, (C, tc)

    # x stays in its native dtype in HBM; kernel A casts the tile on the VPU.
    x_flat = x.reshape(N, C, HW)

    y_packed = ppm_pool_conv(x_flat, mpoolT, w_all, bias_all,
                             nbins=nbins, red_dim=red_dim, bbs=bbs, offs=offs,
                             bb_max=bb_max, tc=tc, vmem_cap=vmem_cap)
    # branch output in compute dtype (bf16 fast path halves HBM writeback)
    out_b = ppm_upsample(y_packed, mup, HW=HW, out_dtype=compute_dtype,
                         vmem_cap=vmem_cap)                  # (N, nbins, red_dim, HW)

    # TODO(synk): torch.cat with x is kept as an XLA concat to preserve the module's
    # return contract; a fused pipeline would return (x, branch) separately or write
    # the branch into an aliased preallocated buffer to avoid re-copying x.
    branch = out_b.reshape(N, nbins * red_dim, H, W).astype(x.dtype)
    return jnp.concatenate([x, branch], axis=1)


# ---------------------------- pure-JAX reference -------------------------------

def ppm_reference(x, params, eps=1e-5):
    N, C, H, W = x.shape
    outs = [x]
    for p in params:
        b = p["bin"]
        Ph = jnp.asarray(adaptive_pool_matrix(b, H))
        Pw = jnp.asarray(adaptive_pool_matrix(b, W))
        Uh = jnp.asarray(upsample_matrix(H, b))
        Uw = jnp.asarray(upsample_matrix(W, b))
        pooled = jnp.einsum('ph,nchw->ncpw', Ph, x)
        pooled = jnp.einsum('qw,ncpw->ncpq', Pw, pooled)
        y = jnp.einsum('rc,ncpq->nrpq', p["conv_w"], pooled)
        y = (y - p["mean"][None, :, None, None]) \
            / jnp.sqrt(p["var"][None, :, None, None] + eps) \
            * p["gamma"][None, :, None, None] + p["beta"][None, :, None, None]
        y = jnp.maximum(y, 0.0)
        up = jnp.einsum('hp,nrpq->nrhq', Uh, y)
        up = jnp.einsum('wq,nrhq->nrhw', Uw, up)
        outs.append(up)
    return jnp.concatenate(outs, axis=1)


# ----------------------------------- main --------------------------------------

if __name__ == "__main__":
    N, C, H, W = 2, 4, 16, 16
    reduction_dim = 4
    bins = (1, 2, 3, 6)

    key = jax.random.PRNGKey(0)
    kx, kp = jax.random.split(key)
    x = jax.random.normal(kx, (N, C, H, W), jnp.float32)
    params = make_ppm_params(kp, C, reduction_dim, bins)

    ref = jax.block_until_ready(ppm_reference(x, params))
    expected_shape = (N, C + len(bins) * reduction_dim, H, W)

    # exactness check: f32 compute path
    out_f32 = jax.block_until_ready(
        ppm_forward(x, params, compute_dtype=jnp.float32))
    assert out_f32.shape == expected_shape, out_f32.shape
    np.testing.assert_allclose(np.asarray(out_f32), np.asarray(ref),
                               rtol=1e-4, atol=1e-4)

    # fast path: bf16 weights/constants/branch-output (f32 accumulation), looser tol
    out_bf16 = jax.block_until_ready(
        ppm_forward(x, params, compute_dtype=jnp.bfloat16))
    assert out_bf16.shape == expected_shape, out_bf16.shape
    np.testing.assert_allclose(np.asarray(out_bf16), np.asarray(ref),
                               rtol=3e-2, atol=3e-2)

    print("KERNEL_OK")
</pallas_src>

<mosaic_0001>
module attributes {stable_mosaic.version = 11 : i64} {
  func.func @_pool_conv_kernel(%arg0: i32, %arg1: i32, %arg2: memref<1x4x256xf32, #tpu.memory_space<vmem>>, %arg3: memref<256x50xf32, #tpu.memory_space<vmem>>, %arg4: memref<16x4xf32, #tpu.memory_space<vmem>>, %arg5: memref<16x1xf32, #tpu.memory_space<vmem>>, %arg6: memref<1x4x4x36xf32, #tpu.memory_space<vmem>>, %arg7: memref<16x50xf32, #tpu.memory_space<vmem>>) attributes {dimension_semantics = [#tpu.dimension_semantics<parallel>, #tpu.dimension_semantics<arbitrary>], iteration_bounds = array<i64: 2, 1>, scalar_prefetch = 0 : i64, scratch_operands = 1 : i64, tpu.core_type = #tpu.core_type<tc>, window_params = [{transform_indices = @transform_0, window_bounds = array<i64: 1, 4, 256>}, {pipeline_mode = #tpu.pipeline_mode<synchronous>, transform_indices = @transform_1, window_bounds = array<i64: 256, 50>}, {transform_indices = @transform_2, window_bounds = array<i64: 16, 4>}, {pipeline_mode = #tpu.pipeline_mode<synchronous>, transform_indices = @transform_3, window_bounds = array<i64: 16, 1>}, {transform_indices = @transform_4, window_bounds = array<i64: 1, 4, 4, 36>}]} {
    %c0_i32 = arith.constant 0 : i32
    %0 = arith.cmpi eq, %arg1, %c0_i32 : i32
    %1 = arith.extui %0 : i1 to i32
    %c0_i32_0 = arith.constant 0 : i32
    %2 = arith.cmpi ne, %1, %c0_i32_0 : i32
    scf.if %2 {
      %c0_14 = arith.constant 0 : index
      %c0_15 = arith.constant 0 : index
      %15 = vector.load %arg5[%c0_14, %c0_15] : memref<16x1xf32, #tpu.memory_space<vmem>>, vector<16x1xf32>
      %16 = vector.shape_cast %15 : vector<16x1xf32> to vector<16x1xf32>
      %17 = vector.broadcast %16 : vector<16x1xf32> to vector<16x50xf32>
      %c0_16 = arith.constant 0 : index
      %c0_17 = arith.constant 0 : index
      %18 = vector.load %arg7[%c0_16, %c0_17] : memref<16x50xf32, #tpu.memory_space<vmem>>, vector<16x50xf32>
      tpu.vector_store %arg7[%c0_16, %c0_17], %17 {strides = array<i32>} : memref<16x50xf32, #tpu.memory_space<vmem>>, vector<16x50xf32>,
    } else {
    }
    %c0 = arith.constant 0 : index
    %c0_1 = arith.constant 0 : index
    %c0_2 = arith.constant 0 : index
    %3 = vector.load %arg2[%c0, %c0_1, %c0_2] : memref<1x4x256xf32, #tpu.memory_space<vmem>>, vector<1x4x256xf32>
    %4 = vector.shape_cast %3 : vector<1x4x256xf32> to vector<4x256xf32>
    %c0_3 = arith.constant 0 : index
    %c0_4 = arith.constant 0 : index
    %5 = vector.load %arg3[%c0_3, %c0_4] : memref<256x50xf32, #tpu.memory_space<vmem>>, vector<256x50xf32>
    %cst = arith.constant dense<0.000000e+00> : vector<4x50xf32>
    %6 = tpu.matmul %4, %5, %cst {dimension_numbers = #tpu.dot_dimension_numbers<[1], [0], [0], [1], [0, 0, 1, 1], [], []>} : vector<4x256xf32>, vector<256x50xf32>, vector<4x50xf32> -> vector<4x50xf32>
    %c0_5 = arith.constant 0 : index
    %c0_6 = arith.constant 0 : index
    %7 = vector.load %arg7[%c0_5, %c0_6] : memref<16x50xf32, #tpu.memory_space<vmem>>, vector<16x50xf32>
    %c0_7 = arith.constant 0 : index
    %c0_8 = arith.constant 0 : index
    %8 = vector.load %arg4[%c0_7, %c0_8] : memref<16x4xf32, #tpu.memory_space<vmem>>, vector<16x4xf32>
    %cst_9 = arith.constant dense<0.000000e+00> : vector<16x50xf32>
    %9 = tpu.matmul %8, %6, %cst_9 {dimension_numbers = #tpu.dot_dimension_numbers<[1], [0], [0], [1], [0, 0, 1, 1], [], []>} : vector<16x4xf32>, vector<4x50xf32>, vector<16x50xf32> -> vector<16x50xf32>
    %10 = arith.addf %7, %9 : vector<16x50xf32>
    %c0_10 = arith.constant 0 : index
    %c0_11 = arith.constant 0 : index
    %11 = vector.load %arg7[%c0_10, %c0_11] : memref<16x50xf32, #tpu.memory_space<vmem>>, vector<16x50xf32>
    tpu.vector_store %arg7[%c0_10, %c0_11], %10 {strides = array<i32>} : memref<16x50xf32, #tpu.memory_space<vmem>>, vector<16x50xf32>,
    %c0_i32_12 = arith.constant 0 : i32
    %12 = arith.cmpi eq, %arg1, %c0_i32_12 : i32
    %13 = arith.extui %12 : i1 to i32
    %c0_i32_13 = arith.constant 0 : i32
    %14 = arith.cmpi ne, %13, %c0_i32_13 : i32
    scf.if %14 {
      %c0_14 = arith.constant 0 : index
      %c0_15 = arith.constant 0 : index
      %15 = vector.load %arg7[%c0_14, %c0_15] : memref<16x50xf32, #tpu.memory_space<vmem>>, vector<16x50xf32>
      %cst_16 = arith.constant 0.000000e+00 : f32
      %16 = vector.broadcast %cst_16 : f32 to vector<16x50xf32>
      %17 = arith.maximumf %15, %16 : vector<16x50xf32>
      %18 = vector.extract_strided_slice %17 {offsets = [0, 0], sizes = [4, 1], strides = [1, 1]} : vector<16x50xf32> to vector<4x1xf32>
      %cst_17 = arith.constant 0.000000e+00 : f32
      %19 = vector.broadcast %cst_17 : f32 to vector<4x35xf32>
      %20 = tpu.concatenate %18, %19 in 1 : vector<4x1xf32>, vector<4x35xf32> -> vector<4x36xf32>
      %c0_18 = arith.constant 0 : index
      %c0_19 = arith.constant 0 : index
      %c0_20 = arith.constant 0 : index
      %c0_21 = arith.constant 0 : index
      %21 = vector.load %arg6[%c0_18, %c0_19, %c0_20, %c0_21] : memref<1x4x4x36xf32, #tpu.memory_space<vmem>>, vector<1x1x4x36xf32>
      %22 = vector.shape_cast %21 : vector<1x1x4x36xf32> to vector<4x36xf32>
      %23 = vector.shape_cast %20 : vector<4x36xf32> to vector<1x1x4x36xf32>
      tpu.vector_store %arg6[%c0_18, %c0_19, %c0_20, %c0_21], %23 {strides = array<i32>} : memref<1x4x4x36xf32, #tpu.memory_space<vmem>>, vector<1x1x4x36xf32>,
      %24 = vector.extract_strided_slice %17 {offsets = [4, 1], sizes = [4, 4], strides = [1, 1]} : vector<16x50xf32> to vector<4x4xf32>
      %cst_22 = arith.constant 0.000000e+00 : f32
      %25 = vector.broadcast %cst_22 : f32 to vector<4x32xf32>
      %26 = tpu.concatenate %24, %25 in 1 : vector<4x4xf32>, vector<4x32xf32> -> vector<4x36xf32>
      %c0_23 = arith.constant 0 : index
      %c1 = arith.constant 1 : index
      %c0_24 = arith.constant 0 : index
      %c0_25 = arith.constant 0 : index
      %27 = vector.load %arg6[%c0_23, %c1, %c0_24, %c0_25] : memref<1x4x4x36xf32, #tpu.memory_space<vmem>>, vector<1x1x4x36xf32>
      %28 = vector.shape_cast %27 : vector<1x1x4x36xf32> to vector<4x36xf32>
      %29 = vector.shape_cast %26 : vector<4x36xf32> to vector<1x1x4x36xf32>
      tpu.vector_store %arg6[%c0_23, %c1, %c0_24, %c0_25], %29 {strides = array<i32>} : memref<1x4x4x36xf32, #tpu.memory_space<vmem>>, vector<1x1x4x36xf32>,
      %30 = vector.extract_strided_slice %17 {offsets = [8, 5], sizes = [4, 9], strides = [1, 1]} : vector<16x50xf32> to vector<4x9xf32>
      %cst_26 = arith.constant 0.000000e+00 : f32
      %31 = vector.broadcast %cst_26 : f32 to vector<4x27xf32>
      %32 = tpu.concatenate %30, %31 in 1 : vector<4x9xf32>, vector<4x27xf32> -> vector<4x36xf32>
      %c0_27 = arith.constant 0 : index
      %c2 = arith.constant 2 : index
      %c0_28 = arith.constant 0 : index
      %c0_29 = arith.constant 0 : index
      %33 = vector.load %arg6[%c0_27, %c2, %c0_28, %c0_29] : memref<1x4x4x36xf32, #tpu.memory_space<vmem>>, vector<1x1x4x36xf32>
      %34 = vector.shape_cast %33 : vector<1x1x4x36xf32> to vector<4x36xf32>
      %35 = vector.shape_cast %32 : vector<4x36xf32> to vector<1x1x4x36xf32>
      tpu.vector_store %arg6[%c0_27, %c2, %c0_28, %c0_29], %35 {strides = array<i32>} : memref<1x4x4x36xf32, #tpu.memory_space<vmem>>, vector<1x1x4x36xf32>,
      %36 = vector.extract_strided_slice %17 {offsets = [12, 14], sizes = [4, 36], strides = [1, 1]} : vector<16x50xf32> to vector<4x36xf32>
      %c0_30 = arith.constant 0 : index
      %c3 = arith.constant 3 : index
      %c0_31 = arith.constant 0 : index
      %c0_32 = arith.constant 0 : index
      %37 = vector.load %arg6[%c0_30, %c3, %c0_31, %c0_32] : memref<1x4x4x36xf32, #tpu.memory_space<vmem>>, vector<1x1x4x36xf32>
      %38 = vector.shape_cast %37 : vector<1x1x4x36xf32> to vector<4x36xf32>
      %39 = vector.shape_cast %36 : vector<4x36xf32> to vector<1x1x4x36xf32>
      tpu.vector_store %arg6[%c0_30, %c3, %c0_31, %c0_32], %39 {strides = array<i32>} : memref<1x4x4x36xf32, #tpu.memory_space<vmem>>, vector<1x1x4x36xf32>,
    } else {
    }
    return
  }
  func.func @transform_0(%arg0: i32, %arg1: i32) -> (i32, i32, i32) {
    %c0_i32 = arith.constant 0 : i32
    %c0_i32_0 = arith.constant 0 : i32
    return %arg0, %arg1, %c0_i32 : i32, i32, i32
  }
  func.func @transform_1(%arg0: i32, %arg1: i32) -> (i32, i32) {
    %c0_i32 = arith.constant 0 : i32
    %c0_i32_0 = arith.constant 0 : i32
    %c0_i32_1 = arith.constant 0 : i32
    return %c0_i32, %c0_i32_0 : i32, i32
  }
  func.func @transform_2(%arg0: i32, %arg1: i32) -> (i32, i32) {
    %c0_i32 = arith.constant 0 : i32
    %c0_i32_0 = arith.constant 0 : i32
    return %c0_i32, %arg1 : i32, i32
  }
  func.func @transform_3(%arg0: i32, %arg1: i32) -> (i32, i32) {
    %c0_i32 = arith.constant 0 : i32
    %c0_i32_0 = arith.constant 0 : i32
    %c0_i32_1 = arith.constant 0 : i32
    return %c0_i32, %c0_i32_0 : i32, i32
  }
  func.func @transform_4(%arg0: i32, %arg1: i32) -> (i32, i32, i32, i32) {
    %c0_i32 = arith.constant 0 : i32
    %c0_i32_0 = arith.constant 0 : i32
    %c0_i32_1 = arith.constant 0 : i32
    %c0_i32_2 = arith.constant 0 : i32
    return %arg0, %c0_i32, %c0_i32_0, %c0_i32_1 : i32, i32, i32, i32
  }
}

</mosaic_0001>

<llo_original>
// kernel: tpu_custom_call.1
$region0: #{tpu_custom_call.1}
  #allocation0 [shape = 'u32[]', space=smem, size = 0x4, offset = 0x4, fixed_abs, tag = 'smem constant byte address 0x4 - core index']
  #allocation1 [shape = 'u32[144,128]{1,0:T(1,128)}', space=vmem, size = 0x12000, scoped, tag = 'internal scratch']
  #allocation2 [shape = 'f32[16,50]{1,0:T(8,128)}', space=vmem, size = 0x2000, scoped, tag = 'scratch operand']
  %s0 = inlined_call_operand.vmem [shape: f32[2,4,256], index: 0, kind: input, shape index: {}]
  %s1 = inlined_call_operand.vmem [shape: f32[256,50], index: 1, kind: input, shape index: {}]
  %s2 = inlined_call_operand.vmem [shape: f32[16,4], index: 2, kind: input, shape index: {}]
  %s3 = inlined_call_operand.vmem [shape: f32[16,1], index: 3, kind: input, shape index: {}]
  %s4 = inlined_call_operand.hbm [shape: f32[2,4,4,36], index: 4, kind: output, shape index: {}]
  %s5 = sld [smem:[#allocation0]]
  $region57: #{tpu_custom_call.1} parent=0
    _
  %s7 = ssub.s32 1, %s5
  %s8 = scalar_select 0, %s7, %s5
  $region1: #{tpu_custom_call.1} parent=0
    #allocation3 [shape = 'u8[16384]{0}', space=vmem, size = 0x4000, scoped, tag = 'output window, operand 0']
    #allocation4 [shape = 's32[2]{0}', space=sflag, size = 0x8, scoped, tag = 'scoped memory for tpu_custom_call.1']
    %9 = vsyncpa [#allocation4], 0
    %s10 = scalar_lea.sflag [#allocation4], 1
    %11 = vsyncpa %s10, 0
    loop: start=0, step=1, limit=4
    $region2: #{tpu_custom_call.1} parent=1 // loop_pre_header
      _
    $region3: #{tpu_custom_call.1} parent=1 // loop_header
      %s13 = sphi 0, %s17
      %p14 = scmp.ge.s32.totalorder %s13, 4
      %s20 = sphi 0, %s32
      %s21 = sphi 0, %s28
      %s22 = sphi 0, %s20
      %s23 = sphi 0, %s21
      %s24 = sphi 0, %s22
      %s25 = sphi 0, %s23
      %s37 = sphi 0, %s39
      %s40 = sphi 0, %s37
      %s41 = sphi 0, %s40
      %s57 = sphi 0, %s41
      %s61 = sphi 0, %s61
      %s63 = sphi 0, %s61
      %s64 = sphi 0, %s63
      %s78 = sphi 0, %s64
      %s84 = sphi 0, %s86
      %s87 = sphi 0, %s84
      %s88 = sphi 0, %s87
      %s104 = sphi 0, %s88
      %s108 = sphi 0, %s108
      %s110 = sphi 0, %s108
      %s111 = sphi 0, %s110
      %s125 = sphi 0, %s111
      %s131 = sphi 0, %s133
      %s134 = sphi 0, %s131
      %s135 = sphi 0, %s134
      %s151 = sphi 0, %s135
    $region4: #{tpu_custom_call.1} parent=1 // loop_header_branch
      %16 = sbr.rel (%p14) target = $region8
    $region5: #{tpu_custom_call.1} parent=1 // loop_body
      %s18 = ssub.s32 %s13, 1
      %s19 = ssub.s32 %s13, 2
      %s26 = sadd.s32 1, %s21
      %p27 = scmp.ge.s32.totalorder %s26, 1
      %s28 = scalar_select %p27, 0, %s26
      %s29 = sadd.s32 1, %s20
      %s30 = scalar_select %p27, %s29, %s20
      %p31 = scmp.ge.s32.totalorder %s30, 2
      %s32 = scalar_select %p31, 0, %s30
      %s33 = ssub.s32 %s20, %s32
      %s34 = ssub.s32 %s21, %s28
      %s35 = sor.u32 %s33, %s34
      %p36 = scmp.eq.s32.totalorder %s35, 0
      %s38 = sadd.s32 %s37, 1
      %s39 = scalar_select %p36, %s37, %s38
      %p42 = pneg %p36
      %p43 = scmp.eq.s32.totalorder %s13, 1
      %p44 = por %p42, %p43
      %p45 = scmp.ne.s32.totalorder %s37, %s40
      %p46 = scmp.eq.s32.totalorder %s13, 0
      %p47 = por %p45, %p46
      %p48 = scmp.ne.s32.totalorder %s37, %s40
      %p49 = scmp.eq.s32.totalorder %s18, 1
      %p50 = por %p48, %p49
      %p51 = scmp.ne.s32.totalorder %s40, %s41
      %p52 = scmp.eq.s32.totalorder %s18, 0
      %p53 = por %p51, %p52
      %p54 = scmp.ne.s32.totalorder %s40, %s41
      %p55 = scmp.eq.s32.totalorder %s19, 1
      %p56 = por %p54, %p55
      %p58 = scmp.ne.s32.totalorder %s41, %s57
      %p59 = scmp.eq.s32.totalorder %s19, 0
      %p60 = por %p58, %p59
      %s62 = sadd.s32 %s61, 1
      %p65 = scmp.eq.s32.totalorder %s13, 1
      %p66 = scmp.ne.s32.totalorder %s61, %s63
      %p67 = scmp.eq.s32.totalorder %s13, 0
      %p68 = por %p66, %p67
      %p69 = scmp.ne.s32.totalorder %s61, %s63
      %p70 = scmp.eq.s32.totalorder %s18, 1
      %p71 = por %p69, %p70
      %p72 = scmp.ne.s32.totalorder %s63, %s64
      %p73 = scmp.eq.s32.totalorder %s18, 0
      %p74 = por %p72, %p73
      %p75 = scmp.ne.s32.totalorder %s63, %s64
      %p76 = scmp.eq.s32.totalorder %s19, 1
      %p77 = por %p75, %p76
      %p79 = scmp.ne.s32.totalorder %s64, %s78
      %p80 = scmp.eq.s32.totalorder %s19, 0
      %p81 = por %p79, %p80
      %s82 = ssub.s32 %s21, %s28
      %p83 = scmp.eq.s32.totalorder %s82, 0
      %s85 = sadd.s32 %s84, 1
      %s86 = scalar_select %p83, %s84, %s85
      %p89 = pneg %p83
      %p90 = scmp.eq.s32.totalorder %s13, 1
      %p91 = por %p89, %p90
      %p92 = scmp.ne.s32.totalorder %s84, %s87
      %p93 = scmp.eq.s32.totalorder %s13, 0
      %p94 = por %p92, %p93
      %p95 = scmp.ne.s32.totalorder %s84, %s87
      %p96 = scmp.eq.s32.totalorder %s18, 1
      %p97 = por %p95, %p96
      %p98 = scmp.ne.s32.totalorder %s87, %s88
      %p99 = scmp.eq.s32.totalorder %s18, 0
      %p100 = por %p98, %p99
      %p101 = scmp.ne.s32.totalorder %s87, %s88
      %p102 = scmp.eq.s32.totalorder %s19, 1
      %p103 = por %p101, %p102
      %p105 = scmp.ne.s32.totalorder %s88, %s104
      %p106 = scmp.eq.s32.totalorder %s19, 0
      %p107 = por %p105, %p106
      %s109 = sadd.s32 %s108, 1
      %p112 = scmp.eq.s32.totalorder %s13, 1
      %p113 = scmp.ne.s32.totalorder %s108, %s110
      %p114 = scmp.eq.s32.totalorder %s13, 0
      %p115 = por %p113, %p114
      %p116 = scmp.ne.s32.totalorder %s108, %s110
      %p117 = scmp.eq.s32.totalorder %s18, 1
      %p118 = por %p116, %p117
      %p119 = scmp.ne.s32.totalorder %s110, %s111
      %p120 = scmp.eq.s32.totalorder %s18, 0
      %p121 = por %p119, %p120
      %p122 = scmp.ne.s32.totalorder %s110, %s111
      %p123 = scmp.eq.s32.totalorder %s19, 1
      %p124 = por %p122, %p123
      %p126 = scmp.ne.s32.totalorder %s111, %s125
      %p127 = scmp.eq.s32.totalorder %s19, 0
      %p128 = por %p126, %p127
      %s129 = ssub.s32 %s20, %s32
      %p130 = scmp.eq.s32.totalorder %s129, 0
      %s132 = sadd.s32 %s131, 1
      %s133 = scalar_select %p130, %s131, %s132
      %p136 = pneg %p130
      %p137 = scmp.eq.s32.totalorder %s13, 1
      %p138 = por %p136, %p137
      %p139 = scmp.ne.s32.totalorder %s131, %s134
      %p140 = scmp.eq.s32.totalorder %s13, 0
      %p141 = por %p139, %p140
      %p142 = scmp.ne.s32.totalorder %s131, %s134
      %p143 = scmp.eq.s32.totalorder %s18, 1
      %p144 = por %p142, %p143
      %p145 = scmp.ne.s32.totalorder %s134, %s135
      %p146 = scmp.eq.s32.totalorder %s18, 0
      %p147 = por %p145, %p146
      %p148 = scmp.ne.s32.totalorder %s134, %s135
      %p149 = scmp.eq.s32.totalorder %s19, 1
      %p150 = por %p148, %p149
      %p152 = scmp.ne.s32.totalorder %s135, %s151
      %p153 = scmp.eq.s32.totalorder %s19, 0
      %p154 = por %p152, %p153
      %p155 = scmp.le.s32.totalorder 1, %s13
      %p156 = scmp.lt.s32.totalorder %s13, 3
      %p157 = pnand %p155, %p156
      %p158 = pneg %p157
      // Predicated region
      $region9: #{tpu_custom_call.1} parent=5 // pred_check
        _
      $region10: #{tpu_custom_call.1} parent=5 // pred_check_branch
        %160 = sbr.rel (%p157) target = $region12
      $region11: #{tpu_custom_call.1} parent=5 // pred_region
        %s161 = ssub.s32 %s13, 1
        // Predicated region
        $region13: #{tpu_custom_call.1} parent=11 // pred_check
          %p162 = pneg %p74
        $region14: #{tpu_custom_call.1} parent=11 // pred_check_branch
          %164 = sbr.rel (%p162) target = $region16
        $region15: #{tpu_custom_call.1} parent=11 // pred_region
          _
        $region16: #{tpu_custom_call.1} parent=11 // pred_fallthru
          _
        // Predicated region
        $region17: #{tpu_custom_call.1} parent=11 // pred_check
          %p165 = pneg %p100
        $region18: #{tpu_custom_call.1} parent=11 // pred_check_branch
          %167 = sbr.rel (%p165) target = $region20
        $region19: #{tpu_custom_call.1} parent=11 // pred_region
          %p168 = scmp.lt.s32.totalorder %s23, 0
          %s169 = scalar_select %p168, %s23, 0
          %s170 = smul.addr %s169, 8
          %s171 = scalar_lea.vmem %s2, %s170
        $region20: #{tpu_custom_call.1} parent=11 // pred_fallthru
          _
        // Predicated region
        $region21: #{tpu_custom_call.1} parent=11 // pred_check
          %p172 = pneg %p121
        $region22: #{tpu_custom_call.1} parent=11 // pred_check_branch
          %174 = sbr.rel (%p172) target = $region24
        $region23: #{tpu_custom_call.1} parent=11 // pred_region
          _
        $region24: #{tpu_custom_call.1} parent=11 // pred_fallthru
          _
      $region12: #{tpu_custom_call.1} parent=5 // pred_fallthru
        _
      %p175 = scmp.lt.s32.totalorder %s13, 2
      // Predicated region
      $region25: #{tpu_custom_call.1} parent=5 // pred_check
        %p176 = pneg %p175
      $region26: #{tpu_custom_call.1} parent=5 // pred_check_branch
        %178 = sbr.rel (%p176) target = $region28
      $region27: #{tpu_custom_call.1} parent=5 // pred_region
        // Predicated region
        $region29: #{tpu_custom_call.1} parent=27 // pred_check
          %p179 = pneg %p47
        $region30: #{tpu_custom_call.1} parent=27 // pred_check_branch
          %181 = sbr.rel (%p179) target = $region32
        $region31: #{tpu_custom_call.1} parent=27 // pred_region
          %p182 = scmp.lt.s32.totalorder %s20, 1
          %s183 = scalar_select %p182, %s20, 1
          %p184 = scmp.lt.s32.totalorder %s21, 0
          %s185 = scalar_select %p184, %s21, 0
          %s186 = smul.addr %s185, 2
          %s187 = smul.addr %s183, 2
          %s188 = sadd.s32 %s186, %s187
          %s189 = smul.addr %s188, 4
          %s190 = scalar_lea.vmem %s0, %s189
        $region32: #{tpu_custom_call.1} parent=27 // pred_fallthru
          _
      $region28: #{tpu_custom_call.1} parent=5 // pred_fallthru
        _
      %p191 = scmp.le.s32.totalorder 1, %s13
      %p192 = scmp.lt.s32.totalorder %s13, 3
      %p193 = pnand %p191, %p192
      %p194 = pneg %p193
      // Predicated region
      $region33: #{tpu_custom_call.1} parent=5 // pred_check
        _
      $region34: #{tpu_custom_call.1} parent=5 // pred_check_branch
        %196 = sbr.rel (%p193) target = $region36
      $region35: #{tpu_custom_call.1} parent=5 // pred_region
        %s197 = ssub.s32 %s13, 1
        %p198 = scmp.lt.s32.totalorder %s22, 1
        %s199 = scalar_select %p198, %s22, 1
        %p200 = scmp.lt.s32.totalorder %s23, 0
        %s201 = scalar_select %p200, %s23, 0
        %s202 = smul.addr %s201, 2
        %s203 = smul.addr %s199, 2
        %s204 = sadd.s32 %s202, %s203
        %s205 = smul.addr %s204, 4
        %s206 = scalar_lea.vmem %s0, %s205
        %p207 = pneg %p53
        %p208 = pneg %p50
        %p209 = pneg %p74
        %p210 = pneg %p71
        %p211 = scmp.lt.s32.totalorder %s23, 0
        %s212 = scalar_select %p211, %s23, 0
        %s213 = smul.addr %s212, 8
        %s214 = scalar_lea.vmem %s2, %s213
        %p215 = pneg %p100
        %p216 = pneg %p97
        %p217 = pneg %p121
        %p218 = pneg %p118
        %p219 = pneg %p147
        %p220 = pneg %p144
        %s221 = sand.u32 %s134, 1
        %s222 = scalar_lea.sflag [#allocation4], %s221
        %s223 = sand.u32 %s134, 1
        %s224 = smul.addr %s223, 16
        %s225 = scalar_lea.vmem [#allocation3], %s224
        %p226 = scmp.lt.s32.totalorder %s22, 1
        %s227 = scalar_select %p226, %s22, 1
        %p228 = scmp.lt.s32.totalorder %s23, 0
        %s229 = scalar_select %p228, %s23, 0
        %s230 = smul.addr %s229, 2
        %s231 = smul.addr %s227, 2
        %s232 = sadd.s32 %s230, %s231
        %s233 = smul.addr %s232, 4
        %s234 = scalar_lea.vmem %s0, %s233
        %p235 = scmp.lt.s32.totalorder %s23, 0
        %s236 = scalar_select %p235, %s23, 0
        %s237 = smul.addr %s236, 8
        %s238 = scalar_lea.vmem %s2, %s237
        %p239 = scmp.eq.s32.totalorder %s23, 0
        // Predicated region
        $region37: #{tpu_custom_call.1} parent=35 // pred_check
          %p240 = pneg %p239
        $region38: #{tpu_custom_call.1} parent=35 // pred_check_branch
          %242 = sbr.rel (%p240) target = $region40
        $region39: #{tpu_custom_call.1} parent=35 // pred_region
          %v243 = vld [vmem:[%s3] sm:$0xff]
          %v244 = vld [vmem:[%s3 + $0x8] sm:$0xff]
          %246 = vset.pattern.permute.xlu0 0
          %247 = vperm.xlu0 %246, %v243
          %v248 = vpop.permute.xlu0 %247
          %251 = vset.pattern.permute.xlu0 0
          %252 = vperm.xlu0 %251, %v244
          %v253 = vpop.permute.xlu0 %252
          %vm255 = vcmask 408576
          %256 = vst.msk [vmem:[#allocation2] sm:$0xff] %vm255, %v248
          %257 = vst.msk [vmem:[#allocation2 + $0x8] sm:$0xff] %vm255, %v253
        $region40: #{tpu_custom_call.1} parent=35 // pred_fallthru
          _
        %v258 = vld [vmem:[%s234] sm:$0xff]
        %v259 = vld [vmem:[%s1] sm:$0xff]
        %v260 = vld [vmem:[%s1 + $0x8] sm:$0xff]
        %v261 = vld [vmem:[%s1 + $0x10] sm:$0xff]
        %v262 = vld [vmem:[%s1 + $0x18] sm:$0xff]
        %v263 = vld [vmem:[%s1 + $0x20] sm:$0xff]
        %v264 = vld [vmem:[%s1 + $0x28] sm:$0xff]
        %v265 = vld [vmem:[%s1 + $0x30] sm:$0xff]
        %v266 = vld [vmem:[%s1 + $0x38] sm:$0xff]
        %v267 = vld [vmem:[%s1 + $0x40] sm:$0xff]
        %v268 = vld [vmem:[%s1 + $0x48] sm:$0xff]
        %v269 = vld [vmem:[%s1 + $0x50] sm:$0xff]
        %v270 = vld [vmem:[%s1 + $0x58] sm:$0xff]
        %v271 = vld [vmem:[%s1 + $0x60] sm:$0xff]
        %v272 = vld [vmem:[%s1 + $0x68] sm:$0xff]
        %v273 = vld [vmem:[%s1 + $0x70] sm:$0xff]
        %v274 = vld [vmem:[%s1 + $0x78] sm:$0xff]
        %v275 = vld [vmem:[%s1 + $0x80] sm:$0xff]
        %v276 = vld [vmem:[%s1 + $0x88] sm:$0xff]
        %v277 = vld [vmem:[%s1 + $0x90] sm:$0xff]
        %v278 = vld [vmem:[%s1 + $0x98] sm:$0xff]
        %v279 = vld [vmem:[%s1 + $0xa0] sm:$0xff]
        %v280 = vld [vmem:[%s1 + $0xa8] sm:$0xff]
        %v281 = vld [vmem:[%s1 + $0xb0] sm:$0xff]
        %v282 = vld [vmem:[%s1 + $0xb8] sm:$0xff]
        %v283 = vld [vmem:[%s1 + $0xc0] sm:$0xff]
        %v284 = vld [vmem:[%s1 + $0xc8] sm:$0xff]
        %v285 = vld [vmem:[%s1 + $0xd0] sm:$0xff]
        %v286 = vld [vmem:[%s1 + $0xd8] sm:$0xff]
        %v287 = vld [vmem:[%s1 + $0xe0] sm:$0xff]
        %v288 = vld [vmem:[%s1 + $0xe8] sm:$0xff]
        %v289 = vld [vmem:[%s1 + $0xf0] sm:$0xff]
        %v290 = vld [vmem:[%s1 + $0xf8] sm:$0xff]
        %v292 = vcombine.high %v258, %v258
        %294 = vmatprep.subr.mxu0 0.0
        %295 = vmatpush1.msra.mxu0 %v259
        %296 = vmatprep.subr.mxu0 0.0
        %297 = vmatpush1.msra.mxu0 %v260
        %298 = vmatprep.subr.mxu0 0.0
        %299 = vmatpush1.msra.mxu0 %v261
        %300 = vmatprep.subr.mxu0 0.0
        %301 = vmatpush1.msra.mxu0 %v262
        %302 = vmatprep.subr.mxu0 0.0
        %303 = vmatpush1.msra.mxu0 %v263
        %304 = vmatprep.subr.mxu0 0.0
        %305 = vmatpush1.msra.mxu0 %v264
        %306 = vmatprep.subr.mxu0 0.0
        %307 = vmatpush1.msra.mxu0 %v265
        %308 = vmatprep.subr.mxu0 0.0
        %309 = vmatpush1.msra.mxu0 %v266
        %310 = vmatprep.subr.mxu0 0.0
        %311 = vmatpush1.msra.mxu0 %v267
        %312 = vmatprep.subr.mxu0 0.0
        %313 = vmatpush1.msra.mxu0 %v268
        %314 = vmatprep.subr.mxu0 0.0
        %315 = vmatpush1.msra.mxu0 %v269
        %316 = vmatprep.subr.mxu0 0.0
        %317 = vmatpush1.msra.mxu0 %v270
        %318 = vmatprep.subr.mxu0 0.0
        %319 = vmatpush1.msra.mxu0 %v271
        %320 = vmatprep.subr.mxu0 0.0
        %321 = vmatpush1.msra.mxu0 %v272
        %322 = vmatprep.subr.mxu0 0.0
        %323 = vmatpush1.msra.mxu0 %v273
        %324 = vmatprep.subr.mxu0 0.0
        %325 = vmatpush1.msra.mxu0 %v274
        %326 = vmatprep.subr.mxu0 0.0
        %327 = vmatpush1.msra.mxu0 %v275
        %328 = vmatprep.subr.mxu0 0.0
        %329 = vmatpush1.msra.mxu0 %v276
        %330 = vmatprep.subr.mxu0 0.0
        %331 = vmatpush1.msra.mxu0 %v277
        %332 = vmatprep.subr.mxu0 0.0
        %333 = vmatpush1.msra.mxu0 %v278
        %334 = vmatprep.subr.mxu0 0.0
        %335 = vmatpush1.msra.mxu0 %v279
        %336 = vmatprep.subr.mxu0 0.0
        %337 = vmatpush1.msra.mxu0 %v280
        %338 = vmatprep.subr.mxu0 0.0
        %339 = vmatpush1.msra.mxu0 %v281
        %340 = vmatprep.subr.mxu0 0.0
        %341 = vmatpush1.msra.mxu0 %v282
        %342 = vmatprep.subr.mxu0 0.0
        %343 = vmatpush1.msra.mxu0 %v283
        %344 = vmatprep.subr.mxu0 0.0
        %345 = vmatpush1.msra.mxu0 %v284
        %346 = vmatprep.subr.mxu0 0.0
        %347 = vmatpush1.msra.mxu0 %v285
        %348 = vmatprep.subr.mxu0 0.0
        %349 = vmatpush1.msra.mxu0 %v286
        %350 = vmatprep.subr.mxu0 0.0
        %351 = vmatpush1.msra.mxu0 %v287
        %352 = vmatprep.subr.mxu0 0.0
        %353 = vmatpush1.msra.mxu0 %v288
        %354 = vmatprep.subr.mxu0 0.0
        %355 = vmatpush1.msra.mxu0 %v289
        %356 = vmatprep.subr.mxu0 0.0
        %357 = vmatpush1.msra.mxu0 %v290
        %358 = vmatprep.mubr.f32.mxu0 %v292
        %359 = vmatmul.mubr.f32.gmra.mrb[0].mxu0 %v258
        %v360 = vpop.f32.mrb[0].mxu0
        %v361 = vadd.f32 0.0, %v360
        %v362 = vpop.f32.mrb[0].mxu0
        %363 = vdwg.mxu0
        %v364 = vld [vmem:[#allocation2] sm:$0xff]
        %v365 = vld [vmem:[#allocation2 + $0x8] sm:$0xff]
        %v366 = vld [vmem:[%s238] sm:$0xff]
        %v367 = vld [vmem:[%s238 + $0x8] sm:$0xff]
        %vm368 = vcmask 31744
        %v370 = vsel %vm368, %v366, 0
        %v373 = vsel %vm368, %v367, 0
        %vm375 = vcmask 1043456
        %v377 = vsel %vm375, %v361, 0
        %379 = vmatprep.subr.mxu0 0.0
        %380 = vmatpush1.msra.mxu0 %v377
        %381 = vmatprep.subr.mxu0 0.0
        %382 = vmatpush1.msra.mxu0 0.0
        %383 = vmatprep.subr.mxu0 0.0
        %384 = vmatpush1.msra.mxu0 0.0
        %385 = vmatprep.subr.mxu0 0.0
        %386 = vmatpush1.msra.mxu0 0.0
        %387 = vmatprep.subr.mxu0 0.0
        %388 = vmatpush1.msra.mxu0 0.0
        %389 = vmatprep.subr.mxu0 0.0
        %390 = vmatpush1.msra.mxu0 0.0
        %391 = vmatprep.subr.mxu0 0.0
        %392 = vmatpush1.msra.mxu0 0.0
        %393 = vmatprep.subr.mxu0 0.0
        %394 = vmatpush1.msra.mxu0 0.0
        %395 = vmatprep.subr.mxu0 0.0
        %396 = vmatpush1.msra.mxu0 0.0
        %397 = vmatprep.subr.mxu0 0.0
        %398 = vmatpush1.msra.mxu0 0.0
        %399 = vmatprep.subr.mxu0 0.0
        %400 = vmatpush1.msra.mxu0 0.0
        %401 = vmatprep.subr.mxu0 0.0
        %402 = vmatpush1.msra.mxu0 0.0
        %403 = vmatprep.subr.mxu0 0.0
        %404 = vmatpush1.msra.mxu0 0.0
        %405 = vmatprep.subr.mxu0 0.0
        %406 = vmatpush1.msra.mxu0 0.0
        %407 = vmatprep.subr.mxu0 0.0
        %408 = vmatpush1.msra.mxu0 0.0
        %409 = vmatprep.subr.mxu0 0.0
        %410 = vmatpush1.msra.mxu0 0.0
        %411 = vmatprep.subr.mxu0 0.0
        %412 = vmatpush1.msra.mxu0 0.0
        %413 = vmatprep.subr.mxu0 0.0
        %414 = vmatpush1.msra.mxu0 0.0
        %415 = vmatprep.subr.mxu0 0.0
        %416 = vmatpush1.msra.mxu0 0.0
        %417 = vmatprep.subr.mxu0 0.0
        %418 = vmatpush1.msra.mxu0 0.0
        %419 = vmatprep.subr.mxu0 0.0
        %420 = vmatpush1.msra.mxu0 0.0
        %421 = vmatprep.subr.mxu0 0.0
        %422 = vmatpush1.msra.mxu0 0.0
        %423 = vmatprep.subr.mxu0 0.0
        %424 = vmatpush1.msra.mxu0 0.0
        %425 = vmatprep.subr.mxu0 0.0
        %426 = vmatpush1.msra.mxu0 0.0
        %427 = vmatprep.subr.mxu0 0.0
        %428 = vmatpush1.msra.mxu0 0.0
        %429 = vmatprep.subr.mxu0 0.0
        %430 = vmatpush1.msra.mxu0 0.0
        %431 = vmatprep.subr.mxu0 0.0
        %432 = vmatpush1.msra.mxu0 0.0
        %433 = vmatprep.subr.mxu0 0.0
        %434 = vmatpush1.msra.mxu0 0.0
        %435 = vmatprep.subr.mxu0 0.0
        %436 = vmatpush1.msra.mxu0 0.0
        %437 = vmatprep.subr.mxu0 0.0
        %438 = vmatpush1.msra.mxu0 0.0
        %439 = vmatprep.subr.mxu0 0.0
        %440 = vmatpush1.msra.mxu0 0.0
        %441 = vmatprep.subr.mxu0 0.0
        %442 = vmatpush1.msra.mxu0 0.0
        %443 = vmatprep.mubr.f32.mxu0 0.0
        %444 = vmatmul.mubr.f32.gmra.mrb[0].mxu0 %v370
        %v445 = vpop.f32.mrb[0].mxu0
        %v446 = vadd.f32 0.0, %v445
        %v447 = vpop.f32.mrb[0].mxu0
        %448 = vmatprep.mubr.f32.mxu0 0.0
        %449 = vmatmul.mubr.f32.gmra.mrb[0].mxu0 %v373
        %v450 = vpop.f32.mrb[0].mxu0
        %v451 = vadd.f32 0.0, %v450
        %v452 = vpop.f32.mrb[0].mxu0
        %453 = vdwg.mxu0
        %v454 = vadd.f32 %v364, %v446
        %v455 = vadd.f32 %v365, %v451
        %vm456 = vcmask 408576
        %457 = vst.msk [vmem:[#allocation2] sm:$0xff] %vm456, %v454
        %458 = vst.msk [vmem:[#allocation2 + $0x8] sm:$0xff] %vm456, %v455
        // Predicated region
        $region41: #{tpu_custom_call.1} parent=35 // pred_check
          %p459 = pneg %p239
        $region42: #{tpu_custom_call.1} parent=35 // pred_check_branch
          %461 = sbr.rel (%p459) target = $region44
        $region43: #{tpu_custom_call.1} parent=35 // pred_region
          %v462 = vld [vmem:[#allocation2] sm:$0xff]
          %v463 = vld [vmem:[#allocation2 + $0x8] sm:$0xff]
          %v464 = vmax.f32 %v462, 0.0
          %v465 = vmax.f32 %v463, 0.0
          %vm466 = vcmask 7168
          %v467 = vsel %vm466, %v464, 0.0
          %vm468 = vcmask 289792
          %469 = vst.msk [vmem:[%s225] sm:$0xf] %vm468, %v467
          %471 = vrot.lane.b32.xlu0 %v464, 127
          %v472 = vpop.permute.xlu0 %471
          %v474 = vsel %vm368, %v472, 0.0
          %s475 = scalar_lea.vmem %s225, 4 [#allocation3]
          %vm476 = vcmask 293892
          %477 = vst.msk [vmem:[%s475 - $0x4] sm:$0xf0] %vm476, %v474
          %479 = vrot.lane.b32.xlu0 %v465, 123
          %v480 = vpop.permute.xlu0 %479
          %vm482 = vcmask 72704
          %v483 = vsel %vm482, %v480, 0.0
          %s484 = scalar_lea.vmem %s225, 8 [#allocation3]
          %485 = vst.msk [vmem:[%s484] sm:$0xf] %vm468, %v483
          %486 = vrot.lane.b32.xlu0 %v465, 114
          %v487 = vpop.permute.xlu0 %486
          %s489 = scalar_lea.vmem %s225, 12 [#allocation3]
          %490 = vst.msk [vmem:[%s489 - $0x4] sm:$0xf0] %vm476, %v487
        $region44: #{tpu_custom_call.1} parent=35 // pred_fallthru
          _
        %s491 = sand.u32 %s134, 1
        %s492 = scalar_lea.sflag [#allocation4], %s491
        %s493 = sand.u32 %s134, 1
        %s494 = smul.addr %s493, 16
        %s495 = scalar_lea.vmem [#allocation3], %s494
        // Predicated region
        $region45: #{tpu_custom_call.1} parent=35 // pred_check
          %p496 = pneg %p144
        $region46: #{tpu_custom_call.1} parent=35 // pred_check_branch
          %498 = sbr.rel (%p496) target = $region48
        $region47: #{tpu_custom_call.1} parent=35 // pred_region
          %s500 = ssub.s32 256, 256
          %501 = vsyncadd %s492, %s500
          %s502 = smul.addr %s22, 4
          %s503 = smul.addr %s502, 64
          %s504 = scalar_lea.hbm %s4, %s503
          %s505 = sshll.u32 %s495, 4
          %s506 = int_to_ptr.vmem [resolvable:$true] %s505
          %511 = dma.vmem_to_hbm [thread:$0]  %s506, 256, %s504, %s492, 64, 64, 4
        $region48: #{tpu_custom_call.1} parent=35 // pred_fallthru
          _
      $region36: #{tpu_custom_call.1} parent=5 // pred_fallthru
        _
      %p512 = scmp.le.s32.totalorder 2, %s13
      // Predicated region
      $region49: #{tpu_custom_call.1} parent=5 // pred_check
        %p513 = pneg %p512
      $region50: #{tpu_custom_call.1} parent=5 // pred_check_branch
        %515 = sbr.rel (%p513) target = $region52
      $region51: #{tpu_custom_call.1} parent=5 // pred_region
        %s516 = ssub.s32 %s13, 2
        // Predicated region
        $region53: #{tpu_custom_call.1} parent=51 // pred_check
          %p517 = pneg %p150
        $region54: #{tpu_custom_call.1} parent=51 // pred_check_branch
          %519 = sbr.rel (%p517) target = $region56
        $region55: #{tpu_custom_call.1} parent=51 // pred_region
          %s520 = sand.u32 %s135, 1
          %s521 = scalar_lea.sflag [#allocation4], %s520
          %s522 = sand.u32 %s135, 1
          %s523 = smul.addr %s522, 16
          %s524 = scalar_lea.vmem [#allocation3], %s523
          %525 = dma.done %s521, 256
        $region56: #{tpu_custom_call.1} parent=51 // pred_fallthru
          _
      $region52: #{tpu_custom_call.1} parent=5 // pred_fallthru
        _
    $region6: #{tpu_custom_call.1} parent=1 // loop_footer
      %s17 = sadd.s32 1, %s13
    $region7: #{tpu_custom_call.1} parent=1 // loop_footer_branch
      %12 = sbr.rel target = $region3
    $region8: #{tpu_custom_call.1} parent=1 // loop_exit
      _
    %526 = vsyncpa [#allocation4], 1
    %s527 = scalar_lea.sflag [#allocation4], 1
    %528 = vsyncpa %s527, 1

</llo_original>
